<compile_context>
chip_gen: v5e
topology: v5e:2x2
jax: 0.10.0
libtpu: 0.0.40
codegen_flags: <defaults>
</compile_context>

<pallas_src>
import functools

import jax
import jax.numpy as jnp
from jax.experimental import pallas as pl
from jax.experimental.pallas import tpu as pltpu


# ------------------------------ helpers ------------------------------------ #
def _round_up(x, m):
    return (x + m - 1) // m * m


def _pad_to(x, shape):
    pads = [(0, t - s) for s, t in zip(x.shape, shape)]
    return jnp.pad(x, pads)


# ----------------------------- Pallas kernel ------------------------------- #
def simpgcn_layer_kernel(a_ref, aknn_ref, xwk_ref, s_ref, xwi_ref, dk_ref,
                         b_ref, out_ref, acc_ref, *, gamma):
    """Grid = (row tiles i [parallel], reduction tiles k [arbitrary]).

    a_ref, aknn_ref : (TM, TK)  adjacency tiles (bf16 stream)
    xwk_ref         : (TK, Fp)  X@W rows for the reduction tile (bf16 stream)
    s_ref, dk_ref   : (TM, 1)   per-output-row gate / Dk projection (f32)
    xwi_ref         : (TM, Fp)  X@W rows for the output tile (f32, self term)
    b_ref           : (1, Fp)   layer bias (f32)
    out_ref         : (TM, Fp)  f32 output tile
    acc_ref         : (TM, Fp)  f32 VMEM accumulator scratch
    """
    k = pl.program_id(1)

    @pl.when(k == 0)
    def _():
        acc_ref[...] = jnp.zeros_like(acc_ref)

    # Blend the two adjacencies on the VPU (f32 -- safe on v5e which has no
    # bf16 VPU), then do a single bf16 MXU matmul with f32 accumulation.
    s = s_ref[...]                                        # (TM, 1) f32
    a_blend = (s * a_ref[...].astype(jnp.float32)
               + (1.0 - s) * aknn_ref[...].astype(jnp.float32))
    acc_ref[...] += jnp.dot(a_blend.astype(xwk_ref.dtype), xwk_ref[...],
                            preferred_element_type=jnp.float32)

    @pl.when(k == pl.num_programs(1) - 1)
    def _():
        # Finalize: s*b + (1-s)*b == b, plus the similarity-preserving term.
        # NOTE: identity activation (module default acts=[None]); a non-None
        # activation would forbid the blended-matmul fusion.
        b = b_ref[...]                                    # (1, Fp)
        tmp = xwi_ref[...] + b                            # xw + b  (TM, Fp)
        out_ref[...] = acc_ref[...] + b + gamma * dk_ref[...] * tmp


# ------------------------------ wrappers ------------------------------------ #
def prepare_adjacency(a_hat, a_knn_hat, *, tile=512,
                      stream_dtype=jnp.bfloat16):
    """Pad both dense adjacencies to a tile-aligned square and cast for streaming."""
    n = a_hat.shape[0]
    np_ = _round_up(n, 128)            # lane alignment for A's last dim
    tile_eff = min(tile, np_)
    np_ = _round_up(np_, tile_eff)     # evenly divisible grid
    a_hat_p = _pad_to(a_hat, (np_, np_)).astype(stream_dtype)
    a_knn_p = _pad_to(a_knn_hat, (np_, np_)).astype(stream_dtype)
    return a_hat_p, a_knn_p


def simpgcn_layer(feat, w, b, scores, s_bias, d_k, d_bias,
                  a_hat_p, a_knn_p, *, gamma=0.1, tile=512,
                  stream_dtype=jnp.bfloat16):
    """One SimPGCN layer. feat: (N, Fin) f32, a_*_p: padded (Np, Np) adjacency."""
    n = feat.shape[0]
    f_out = w.shape[1]
    np_ = a_hat_p.shape[0]
    tile_eff = min(tile, np_)
    assert np_ % tile_eff == 0
    fp = _round_up(f_out, 128)         # lane-dense output width

    feat = feat.astype(jnp.float32)
    # Hoisted projections (O(N*F); tiny next to the N^2 adjacency streaming).
    xw = feat @ w.astype(jnp.float32)                               # (N, Fout)
    s = jax.nn.sigmoid(feat @ scores.astype(jnp.float32) + s_bias)  # (N, 1)
    dk = feat @ d_k.astype(jnp.float32) + d_bias                    # (N, 1)

    xw_p = _pad_to(xw, (np_, fp)).astype(jnp.float32)    # self term (f32)
    xw_stream = xw_p.astype(stream_dtype)                # reduction operand
    s_p = _pad_to(s, (np_, 1)).astype(jnp.float32)
    dk_p = _pad_to(dk, (np_, 1)).astype(jnp.float32)
    b_p = _pad_to(b.reshape(1, f_out).astype(jnp.float32), (1, fp))

    grid = (np_ // tile_eff, np_ // tile_eff)
    kernel = functools.partial(simpgcn_layer_kernel, gamma=gamma)

    out_p = pl.pallas_call(
        kernel,
        out_shape=jax.ShapeDtypeStruct((np_, fp), jnp.float32),
        grid_spec=pltpu.PrefetchScalarGridSpec(
            num_scalar_prefetch=0,
            grid=grid,
            in_specs=[
                pl.BlockSpec((tile_eff, tile_eff), lambda i, k: (i, k)),  # A_hat
                pl.BlockSpec((tile_eff, tile_eff), lambda i, k: (i, k)),  # A_knn
                pl.BlockSpec((tile_eff, fp), lambda i, k: (k, 0)),  # xw (stream)
                pl.BlockSpec((tile_eff, 1), lambda i, k: (i, 0)),   # s gate
                pl.BlockSpec((tile_eff, fp), lambda i, k: (i, 0)),  # xw (self, f32)
                pl.BlockSpec((tile_eff, 1), lambda i, k: (i, 0)),   # Dk
                pl.BlockSpec((1, fp), lambda i, k: (0, 0)),         # bias
            ],
            out_specs=pl.BlockSpec((tile_eff, fp), lambda i, k: (i, 0)),
            scratch_shapes=[pltpu.VMEM((tile_eff, fp), jnp.float32)],
        ),
        compiler_params=pltpu.CompilerParams(
            dimension_semantics=("parallel", "arbitrary"),
            vmem_limit_bytes=48 * 1024 * 1024),
    )(a_hat_p, a_knn_p, xw_stream, s_p, xw_p, dk_p, b_p)

    # TODO(synk): for sparse graphs, skip all-zero (TM,TK) A tiles with a
    # per-row-tile nonzero block list via PrefetchScalarGridSpec scalar prefetch.
    return out_p[:n, :f_out]


def simpgcn_forward(feat, params, a_hat_p, a_knn_p, *, gamma=0.1,
                    tile=512, stream_dtype=jnp.bfloat16):
    h = feat
    for (w, b, sc, sb, dkw, db) in params:
        h = simpgcn_layer(h, w, b, sc, sb, dkw, db, a_hat_p, a_knn_p,
                          gamma=gamma, tile=tile, stream_dtype=stream_dtype)
    return h


# ------------------------------ JAX glue ------------------------------------ #
def sym_norm(adj, add_self_loop):
    """GCN 'both' normalization: D^{-1/2} (A [+ I]) D^{-1/2}."""
    n = adj.shape[0]
    if add_self_loop:
        adj = adj + jnp.eye(n, dtype=adj.dtype)
    deg = adj.sum(axis=1)
    dinv = jnp.where(deg > 0, deg ** -0.5, 0.0)
    return dinv[:, None] * adj * dinv[None, :]


def knn_adj(feat, k):
    """Cosine-similarity kNN graph (symmetrized), dense adjacency.
    # TODO(synk): graphwar.knn_graph may differ in edge direction / k;
    # this is a faithful dense stand-in for the synthetic test."""
    n = feat.shape[0]
    norm = jnp.linalg.norm(feat, axis=1, keepdims=True)
    fn = feat / jnp.maximum(norm, 1e-12)
    sim = fn @ fn.T
    sim = sim - 10.0 * jnp.eye(n)          # exclude self from neighbors
    _, idx = jax.lax.top_k(sim, k)
    adj = jnp.zeros((n, n), jnp.float32)
    adj = adj.at[jnp.arange(n)[:, None], idx].set(1.0)
    return jnp.maximum(adj, adj.T)


def xavier_uniform(key, shape):
    fan_in, fan_out = shape[0], shape[1]
    bound = (6.0 / (fan_in + fan_out)) ** 0.5
    return jax.random.uniform(key, shape, jnp.float32, -bound, bound)


def ref_layer(feat, w, b, scores, s_bias, d_k, d_bias, a_hat, a_knn_hat,
              gamma=0.1):
    xw = feat @ w
    h_g = a_hat @ xw + b
    h_k = a_knn_hat @ xw + b
    tmp = xw + b
    s = jax.nn.sigmoid(feat @ scores + s_bias)
    dk = feat @ d_k + d_bias
    return s * h_g + (1.0 - s) * h_k + gamma * dk * tmp


# --------------------------------- main ------------------------------------- #
if __name__ == "__main__":
    N, in_feats, hid, out_feats = 32, 16, 64, 8     # module defaults: hids=[64]
    gamma = 0.1

    key = jax.random.PRNGKey(0)
    keys = jax.random.split(key, 10)

    feat = jax.random.normal(keys[0], (N, in_feats), jnp.float32)

    # Random undirected input graph (no self loops in raw adjacency).
    probs = jax.random.uniform(keys[1], (N, N))
    adj = (probs < 0.15).astype(jnp.float32)
    adj = jnp.maximum(adj, adj.T) * (1.0 - jnp.eye(N, dtype=jnp.float32))
    a_hat = sym_norm(adj, add_self_loop=True)             # layer default
    a_knn_hat = sym_norm(knn_adj(feat, k=4), add_self_loop=False)

    # Deterministic parameter init (xavier weights, zero biases).
    w0 = xavier_uniform(keys[2], (in_feats, hid))
    b0 = jnp.zeros((hid,), jnp.float32)
    w1 = xavier_uniform(keys[3], (hid, out_feats))
    b1 = jnp.zeros((out_feats,), jnp.float32)
    scores0 = xavier_uniform(keys[4], (in_feats, 1))
    sbias0 = jnp.zeros((1,), jnp.float32)
    dk0 = xavier_uniform(keys[5], (in_feats, 1))
    dbias0 = jnp.zeros((1,), jnp.float32)
    scores1 = xavier_uniform(keys[6], (hid, 1))
    sbias1 = jnp.zeros((1,), jnp.float32)
    dk1 = xavier_uniform(keys[7], (hid, 1))
    dbias1 = jnp.zeros((1,), jnp.float32)

    params = [(w0, b0, scores0, sbias0, dk0, dbias0),
              (w1, b1, scores1, sbias1, dk1, dbias1)]

    TILE = 512   # fits all TPU generations (v7x 64 MiB VMEM); 1024 ok on v5e/v6e

    def run(stream_dtype):
        a_hat_p, a_knn_p = prepare_adjacency(a_hat, a_knn_hat, tile=TILE,
                                             stream_dtype=stream_dtype)
        return simpgcn_forward(feat, params, a_hat_p, a_knn_p, gamma=gamma,
                               tile=TILE, stream_dtype=stream_dtype)

    # Fast path: bf16 adjacency / xw streaming, f32 accumulation.
    out_bf16 = jax.block_until_ready(run(jnp.bfloat16))
    # Exact path: f32 streaming (validates tiling / accumulation bit-tightly).
    out_f32 = jax.block_until_ready(run(jnp.float32))

    # Pure-JAX reference of the same math.
    h_ref = ref_layer(feat, w0, b0, scores0, sbias0, dk0, dbias0,
                      a_hat, a_knn_hat, gamma=gamma)
    out_ref = ref_layer(h_ref, w1, b1, scores1, sbias1, dk1, dbias1,
                        a_hat, a_knn_hat, gamma=gamma)

    assert jnp.allclose(out_f32, out_ref, atol=1e-4, rtol=1e-4), \
        "f32 kernel mismatch"
    assert jnp.allclose(out_bf16, out_ref, atol=1e-1, rtol=1e-1), \
        "bf16 streaming kernel drifted too far"

    print("KERNEL_OK")
</pallas_src>

<mosaic_0001>
module attributes {stable_mosaic.version = 11 : i64} {
  func.func @simpgcn_layer_kernel(%arg0: i32, %arg1: i32, %arg2: memref<128x128xbf16, #tpu.memory_space<vmem>>, %arg3: memref<128x128xbf16, #tpu.memory_space<vmem>>, %arg4: memref<128x128xbf16, #tpu.memory_space<vmem>>, %arg5: memref<128x1xf32, #tpu.memory_space<vmem>>, %arg6: memref<128x128xf32, #tpu.memory_space<vmem>>, %arg7: memref<128x1xf32, #tpu.memory_space<vmem>>, %arg8: memref<1x128xf32, #tpu.memory_space<vmem>>, %arg9: memref<128x128xf32, #tpu.memory_space<vmem>>, %arg10: memref<128x128xf32, #tpu.memory_space<vmem>>) attributes {dimension_semantics = [#tpu.dimension_semantics<parallel>, #tpu.dimension_semantics<arbitrary>], iteration_bounds = array<i64: 1, 1>, scalar_prefetch = 0 : i64, scratch_operands = 1 : i64, tpu.core_type = #tpu.core_type<tc>, window_params = [{transform_indices = @transform_0, window_bounds = array<i64: 128, 128>}, {transform_indices = @transform_1, window_bounds = array<i64: 128, 128>}, {transform_indices = @transform_2, window_bounds = array<i64: 128, 128>}, {transform_indices = @transform_3, window_bounds = array<i64: 128, 1>}, {transform_indices = @transform_4, window_bounds = array<i64: 128, 128>}, {transform_indices = @transform_5, window_bounds = array<i64: 128, 1>}, {pipeline_mode = #tpu.pipeline_mode<synchronous>, transform_indices = @transform_6, window_bounds = array<i64: 1, 128>}, {transform_indices = @transform_7, window_bounds = array<i64: 128, 128>}]} {
    %c0_i32 = arith.constant 0 : i32
    %0 = arith.cmpi eq, %arg1, %c0_i32 : i32
    %1 = arith.extui %0 : i1 to i32
    %c0_i32_0 = arith.constant 0 : i32
    %2 = arith.cmpi ne, %1, %c0_i32_0 : i32
    scf.if %2 {
      %cst_15 = arith.constant 0.000000e+00 : f32
      %24 = vector.broadcast %cst_15 : f32 to vector<128x128xf32>
      %c0_16 = arith.constant 0 : index
      %c0_17 = arith.constant 0 : index
      %25 = vector.load %arg10[%c0_16, %c0_17] : memref<128x128xf32, #tpu.memory_space<vmem>>, vector<128x128xf32>
      tpu.vector_store %arg10[%c0_16, %c0_17], %24 {strides = array<i32>} : memref<128x128xf32, #tpu.memory_space<vmem>>, vector<128x128xf32>,
    } else {
    }
    %c0 = arith.constant 0 : index
    %c0_1 = arith.constant 0 : index
    %3 = vector.load %arg5[%c0, %c0_1] : memref<128x1xf32, #tpu.memory_space<vmem>>, vector<128x1xf32>
    %c0_2 = arith.constant 0 : index
    %c0_3 = arith.constant 0 : index
    %4 = vector.load %arg2[%c0_2, %c0_3] : memref<128x128xbf16, #tpu.memory_space<vmem>>, vector<128x128xbf16>
    %5 = arith.extf %4 : vector<128x128xbf16> to vector<128x128xf32>
    %6 = vector.broadcast %3 : vector<128x1xf32> to vector<128x128xf32>
    %7 = arith.mulf %6, %5 : vector<128x128xf32>
    %cst = arith.constant 1.000000e+00 : f32
    %8 = vector.broadcast %cst : f32 to vector<128x1xf32>
    %9 = arith.subf %8, %3 : vector<128x1xf32>
    %c0_4 = arith.constant 0 : index
    %c0_5 = arith.constant 0 : index
    %10 = vector.load %arg3[%c0_4, %c0_5] : memref<128x128xbf16, #tpu.memory_space<vmem>>, vector<128x128xbf16>
    %11 = arith.extf %10 : vector<128x128xbf16> to vector<128x128xf32>
    %12 = vector.broadcast %9 : vector<128x1xf32> to vector<128x128xf32>
    %13 = arith.mulf %12, %11 : vector<128x128xf32>
    %14 = arith.addf %7, %13 : vector<128x128xf32>
    %c0_6 = arith.constant 0 : index
    %c0_7 = arith.constant 0 : index
    %15 = vector.load %arg10[%c0_6, %c0_7] : memref<128x128xf32, #tpu.memory_space<vmem>>, vector<128x128xf32>
    %16 = arith.truncf %14 : vector<128x128xf32> to vector<128x128xbf16>
    %c0_8 = arith.constant 0 : index
    %c0_9 = arith.constant 0 : index
    %17 = vector.load %arg4[%c0_8, %c0_9] : memref<128x128xbf16, #tpu.memory_space<vmem>>, vector<128x128xbf16>
    %cst_10 = arith.constant dense<0.000000e+00> : vector<128x128xf32>
    %18 = tpu.matmul %16, %17, %cst_10 {dimension_numbers = #tpu.dot_dimension_numbers<[1], [0], [0], [1], [0, 0, 1, 1], [], []>} : vector<128x128xbf16>, vector<128x128xbf16>, vector<128x128xf32> -> vector<128x128xf32>
    %19 = arith.addf %15, %18 : vector<128x128xf32>
    %c0_11 = arith.constant 0 : index
    %c0_12 = arith.constant 0 : index
    %20 = vector.load %arg10[%c0_11, %c0_12] : memref<128x128xf32, #tpu.memory_space<vmem>>, vector<128x128xf32>
    tpu.vector_store %arg10[%c0_11, %c0_12], %19 {strides = array<i32>} : memref<128x128xf32, #tpu.memory_space<vmem>>, vector<128x128xf32>,
    %c0_i32_13 = arith.constant 0 : i32
    %21 = arith.cmpi eq, %arg1, %c0_i32_13 : i32
    %22 = arith.extui %21 : i1 to i32
    %c0_i32_14 = arith.constant 0 : i32
    %23 = arith.cmpi ne, %22, %c0_i32_14 : i32
    scf.if %23 {
      %c0_15 = arith.constant 0 : index
      %c0_16 = arith.constant 0 : index
      %24 = vector.load %arg8[%c0_15, %c0_16] : memref<1x128xf32, #tpu.memory_space<vmem>>, vector<1x128xf32>
      %c0_17 = arith.constant 0 : index
      %c0_18 = arith.constant 0 : index
      %25 = vector.load %arg6[%c0_17, %c0_18] : memref<128x128xf32, #tpu.memory_space<vmem>>, vector<128x128xf32>
      %26 = vector.broadcast %24 : vector<1x128xf32> to vector<128x128xf32>
      %27 = arith.addf %25, %26 : vector<128x128xf32>
      %c0_19 = arith.constant 0 : index
      %c0_20 = arith.constant 0 : index
      %28 = vector.load %arg10[%c0_19, %c0_20] : memref<128x128xf32, #tpu.memory_space<vmem>>, vector<128x128xf32>
      %29 = vector.broadcast %24 : vector<1x128xf32> to vector<128x128xf32>
      %30 = arith.addf %28, %29 : vector<128x128xf32>
      %c0_21 = arith.constant 0 : index
      %c0_22 = arith.constant 0 : index
      %31 = vector.load %arg7[%c0_21, %c0_22] : memref<128x1xf32, #tpu.memory_space<vmem>>, vector<128x1xf32>
      %cst_23 = arith.constant 1.000000e-01 : f32
      %32 = vector.broadcast %cst_23 : f32 to vector<128x1xf32>
      %33 = arith.mulf %32, %31 : vector<128x1xf32>
      %34 = vector.broadcast %33 : vector<128x1xf32> to vector<128x128xf32>
      %35 = arith.mulf %34, %27 : vector<128x128xf32>
      %36 = arith.addf %30, %35 : vector<128x128xf32>
      %c0_24 = arith.constant 0 : index
      %c0_25 = arith.constant 0 : index
      %37 = vector.load %arg9[%c0_24, %c0_25] : memref<128x128xf32, #tpu.memory_space<vmem>>, vector<128x128xf32>
      tpu.vector_store %arg9[%c0_24, %c0_25], %36 {strides = array<i32>} : memref<128x128xf32, #tpu.memory_space<vmem>>, vector<128x128xf32>,
    } else {
    }
    return
  }
  func.func @transform_0(%arg0: i32, %arg1: i32) -> (i32, i32) {
    %c0_i32 = arith.constant 0 : i32
    return %arg0, %arg1 : i32, i32
  }
  func.func @transform_1(%arg0: i32, %arg1: i32) -> (i32, i32) {
    %c0_i32 = arith.constant 0 : i32
    return %arg0, %arg1 : i32, i32
  }
  func.func @transform_2(%arg0: i32, %arg1: i32) -> (i32, i32) {
    %c0_i32 = arith.constant 0 : i32
    %c0_i32_0 = arith.constant 0 : i32
    return %arg1, %c0_i32 : i32, i32
  }
  func.func @transform_3(%arg0: i32, %arg1: i32) -> (i32, i32) {
    %c0_i32 = arith.constant 0 : i32
    %c0_i32_0 = arith.constant 0 : i32
    return %arg0, %c0_i32 : i32, i32
  }
  func.func @transform_4(%arg0: i32, %arg1: i32) -> (i32, i32) {
    %c0_i32 = arith.constant 0 : i32
    %c0_i32_0 = arith.constant 0 : i32
    return %arg0, %c0_i32 : i32, i32
  }
  func.func @transform_5(%arg0: i32, %arg1: i32) -> (i32, i32) {
    %c0_i32 = arith.constant 0 : i32
    %c0_i32_0 = arith.constant 0 : i32
    return %arg0, %c0_i32 : i32, i32
  }
  func.func @transform_6(%arg0: i32, %arg1: i32) -> (i32, i32) {
    %c0_i32 = arith.constant 0 : i32
    %c0_i32_0 = arith.constant 0 : i32
    %c0_i32_1 = arith.constant 0 : i32
    return %c0_i32, %c0_i32_0 : i32, i32
  }
  func.func @transform_7(%arg0: i32, %arg1: i32) -> (i32, i32) {
    %c0_i32 = arith.constant 0 : i32
    %c0_i32_0 = arith.constant 0 : i32
    return %arg0, %c0_i32 : i32, i32
  }
}

</mosaic_0001>

<llo_original>
// kernel: tpu_custom_call.1
$region0: #{tpu_custom_call.1}
  #allocation0 [shape = 'u32[]', space=smem, size = 0x4, offset = 0x4, fixed_abs, tag = 'smem constant byte address 0x4 - core index']
  #allocation1 [shape = 'u32[72,128]{1,0:T(1,128)}', space=vmem, size = 0x9000, scoped, tag = 'internal scratch']
  #allocation2 [shape = 'f32[128,128]{1,0:T(8,128)}', space=vmem, size = 0x10000, scoped, tag = 'scratch operand']
  %s0 = inlined_call_operand.vmem [shape: bf16[128,128], index: 0, kind: input, shape index: {}]
  %s1 = inlined_call_operand.vmem [shape: bf16[128,128], index: 1, kind: input, shape index: {}]
  %s2 = inlined_call_operand.hbm [shape: bf16[128,128], index: 2, kind: input, shape index: {}]
  %s3 = inlined_call_operand.vmem [shape: f32[128,1], index: 3, kind: input, shape index: {}]
  %s4 = inlined_call_operand.vmem [shape: f32[128,128], index: 4, kind: input, shape index: {}]
  %s5 = inlined_call_operand.vmem [shape: f32[128,1], index: 5, kind: input, shape index: {}]
  %s6 = inlined_call_operand.vmem [shape: f32[1,128], index: 6, kind: input, shape index: {}]
  %s7 = inlined_call_operand.hbm [shape: f32[128,128], index: 7, kind: output, shape index: {}]
  %s8 = sld [smem:[#allocation0]]
  $region50: #{tpu_custom_call.1} parent=0
    _
  %s10 = ssub.s32 1, %s8
  %s11 = scalar_select 0, %s10, %s8
  $region1: #{tpu_custom_call.1} parent=0
    #allocation3 [shape = 'u8[32768]{0}', space=vmem, size = 0x8000, scoped, tag = 'input window, operand 2, single buffered']
    #allocation4 [shape = 's32[1]{0}', space=sflag, size = 0x4, scoped, tag = 'scoped memory for tpu_custom_call.1']
    #allocation5 [shape = 's32[1]{0}', space=sflag, size = 0x4, scoped, tag = 'scoped memory for tpu_custom_call.1']
    #allocation6 [shape = 'u8[65536]{0}', space=vmem, size = 0x10000, scoped, tag = 'output window, operand 0, single buffered']
    %12 = vsyncpa [#allocation4], 0
    %13 = vsyncpa [#allocation5], 0
    // Predicated region
    $region2: #{tpu_custom_call.1} parent=1 // pred_check
      _
    $region3: #{tpu_custom_call.1} parent=1 // pred_check_branch
      %15 = sbr.rel (0) target = $region5
    $region4: #{tpu_custom_call.1} parent=1 // pred_region
      _
    $region5: #{tpu_custom_call.1} parent=1 // pred_fallthru
      _
    // Predicated region
    $region6: #{tpu_custom_call.1} parent=1 // pred_check
      _
    $region7: #{tpu_custom_call.1} parent=1 // pred_check_branch
      %17 = sbr.rel (0) target = $region9
    $region8: #{tpu_custom_call.1} parent=1 // pred_region
      _
    $region9: #{tpu_custom_call.1} parent=1 // pred_fallthru
      _
    // Predicated region
    $region10: #{tpu_custom_call.1} parent=1 // pred_check
      _
    $region11: #{tpu_custom_call.1} parent=1 // pred_check_branch
      %19 = sbr.rel (0) target = $region13
    $region12: #{tpu_custom_call.1} parent=1 // pred_region
      %21 = vsyncadd [#allocation4], 0
      %s22 = sshll.u32 %s2, 4
      %s23 = int_to_ptr.hbm [resolvable:$true] %s22
      %s24 = sshll.u32 [#allocation3], 4
      %s25 = int_to_ptr.vmem [resolvable:$true] %s24
      %30 = dma.hbm_to_vmem [thread:$0]  %s23, 1024, %s25, [#allocation4], 64, 64, 4
    $region13: #{tpu_custom_call.1} parent=1 // pred_fallthru
      _
    // Predicated region
    $region14: #{tpu_custom_call.1} parent=1 // pred_check
      _
    $region15: #{tpu_custom_call.1} parent=1 // pred_check_branch
      %32 = sbr.rel (0) target = $region17
    $region16: #{tpu_custom_call.1} parent=1 // pred_region
      _
    $region17: #{tpu_custom_call.1} parent=1 // pred_fallthru
      _
    // Predicated region
    $region18: #{tpu_custom_call.1} parent=1 // pred_check
      _
    $region19: #{tpu_custom_call.1} parent=1 // pred_check_branch
      %34 = sbr.rel (0) target = $region21
    $region20: #{tpu_custom_call.1} parent=1 // pred_region
      _
    $region21: #{tpu_custom_call.1} parent=1 // pred_fallthru
      _
    // Predicated region
    $region22: #{tpu_custom_call.1} parent=1 // pred_check
      _
    $region23: #{tpu_custom_call.1} parent=1 // pred_check_branch
      %36 = sbr.rel (0) target = $region25
    $region24: #{tpu_custom_call.1} parent=1 // pred_region
      _
    $region25: #{tpu_custom_call.1} parent=1 // pred_fallthru
      _
    // Predicated region
    $region26: #{tpu_custom_call.1} parent=1 // pred_check
      _
    $region27: #{tpu_custom_call.1} parent=1 // pred_check_branch
      %38 = sbr.rel (0) target = $region29
    $region28: #{tpu_custom_call.1} parent=1 // pred_region
      _
    $region29: #{tpu_custom_call.1} parent=1 // pred_fallthru
      _
    // Predicated region
    $region30: #{tpu_custom_call.1} parent=1 // pred_check
      _
    $region31: #{tpu_custom_call.1} parent=1 // pred_check_branch
      %40 = sbr.rel (0) target = $region33
    $region32: #{tpu_custom_call.1} parent=1 // pred_region
      %42 = dma.done [#allocation4], 1024
    $region33: #{tpu_custom_call.1} parent=1 // pred_fallthru
      _
    %p43 = scmp.eq.s32.totalorder 0, 0
    // Predicated region
    $region34: #{tpu_custom_call.1} parent=1 // pred_check
      %p44 = pneg %p43
    $region35: #{tpu_custom_call.1} parent=1 // pred_check_branch
      %46 = sbr.rel (%p44) target = $region37
    $region36: #{tpu_custom_call.1} parent=1 // pred_region
      %47 = vst [vmem:[#allocation2] sm:$0xff] 0.0
      %48 = vst [vmem:[#allocation2 + $0x8] sm:$0xff] 0.0
      %49 = vst [vmem:[#allocation2 + $0x10] sm:$0xff] 0.0
      %50 = vst [vmem:[#allocation2 + $0x18] sm:$0xff] 0.0
      %51 = vst [vmem:[#allocation2 + $0x20] sm:$0xff] 0.0
      %52 = vst [vmem:[#allocation2 + $0x28] sm:$0xff] 0.0
      %53 = vst [vmem:[#allocation2 + $0x30] sm:$0xff] 0.0
      %54 = vst [vmem:[#allocation2 + $0x38] sm:$0xff] 0.0
      %55 = vst [vmem:[#allocation2 + $0x40] sm:$0xff] 0.0
      %56 = vst [vmem:[#allocation2 + $0x48] sm:$0xff] 0.0
      %57 = vst [vmem:[#allocation2 + $0x50] sm:$0xff] 0.0
      %58 = vst [vmem:[#allocation2 + $0x58] sm:$0xff] 0.0
      %59 = vst [vmem:[#allocation2 + $0x60] sm:$0xff] 0.0
      %60 = vst [vmem:[#allocation2 + $0x68] sm:$0xff] 0.0
      %61 = vst [vmem:[#allocation2 + $0x70] sm:$0xff] 0.0
      %62 = vst [vmem:[#allocation2 + $0x78] sm:$0xff] 0.0
    $region37: #{tpu_custom_call.1} parent=1 // pred_fallthru
      _
    %v63 = vld [vmem:[%s3] sm:$0xff]
    %v64 = vld [vmem:[%s3 + $0x8] sm:$0xff]
    %v65 = vld [vmem:[%s3 + $0x10] sm:$0xff]
    %v66 = vld [vmem:[%s3 + $0x18] sm:$0xff]
    %v67 = vld [vmem:[%s3 + $0x20] sm:$0xff]
    %v68 = vld [vmem:[%s3 + $0x28] sm:$0xff]
    %v69 = vld [vmem:[%s3 + $0x30] sm:$0xff]
    %v70 = vld [vmem:[%s3 + $0x38] sm:$0xff]
    %v71 = vld [vmem:[%s3 + $0x40] sm:$0xff]
    %v72 = vld [vmem:[%s3 + $0x48] sm:$0xff]
    %v73 = vld [vmem:[%s3 + $0x50] sm:$0xff]
    %v74 = vld [vmem:[%s3 + $0x58] sm:$0xff]
    %v75 = vld [vmem:[%s3 + $0x60] sm:$0xff]
    %v76 = vld [vmem:[%s3 + $0x68] sm:$0xff]
    %v77 = vld [vmem:[%s3 + $0x70] sm:$0xff]
    %v78 = vld [vmem:[%s3 + $0x78] sm:$0xff]
    %v79 = vld [vmem:[%s0] sm:$0xf]
    %v80 = vld [vmem:[%s0 + $0x4] sm:$0xf]
    %v81 = vld [vmem:[%s0 + $0x8] sm:$0xf]
    %v82 = vld [vmem:[%s0 + $0xc] sm:$0xf]
    %v83 = vld [vmem:[%s0 + $0x10] sm:$0xf]
    %v84 = vld [vmem:[%s0 + $0x14] sm:$0xf]
    %v85 = vld [vmem:[%s0 + $0x18] sm:$0xf]
    %v86 = vld [vmem:[%s0 + $0x1c] sm:$0xf]
    %v87 = vld [vmem:[%s0 + $0x20] sm:$0xf]
    %v88 = vld [vmem:[%s0 + $0x24] sm:$0xf]
    %v89 = vld [vmem:[%s0 + $0x28] sm:$0xf]
    %v90 = vld [vmem:[%s0 + $0x2c] sm:$0xf]
    %v91 = vld [vmem:[%s0 + $0x30] sm:$0xf]
    %v92 = vld [vmem:[%s0 + $0x34] sm:$0xf]
    %v93 = vld [vmem:[%s0 + $0x38] sm:$0xf]
    %v94 = vld [vmem:[%s0 + $0x3c] sm:$0xf]
    %v95 = vunpack.c.l.bf16 %v79
    %v96 = vunpack.c.l.bf16 %v80
    %v97 = vunpack.c.l.bf16 %v81
    %v98 = vunpack.c.l.bf16 %v82
    %v99 = vunpack.c.l.bf16 %v83
    %v100 = vunpack.c.l.bf16 %v84
    %v101 = vunpack.c.l.bf16 %v85
    %v102 = vunpack.c.l.bf16 %v86
    %v103 = vunpack.c.l.bf16 %v87
    %v104 = vunpack.c.l.bf16 %v88
    %v105 = vunpack.c.l.bf16 %v89
    %v106 = vunpack.c.l.bf16 %v90
    %v107 = vunpack.c.l.bf16 %v91
    %v108 = vunpack.c.l.bf16 %v92
    %v109 = vunpack.c.l.bf16 %v93
    %v110 = vunpack.c.l.bf16 %v94
    %112 = vset.pattern.permute.xlu0 0
    %113 = vperm.xlu0 %112, %v63
    %v114 = vpop.permute.xlu0 %113
    %117 = vset.pattern.permute.xlu0 0
    %118 = vperm.xlu0 %117, %v64
    %v119 = vpop.permute.xlu0 %118
    %122 = vset.pattern.permute.xlu0 0
    %123 = vperm.xlu0 %122, %v65
    %v124 = vpop.permute.xlu0 %123
    %127 = vset.pattern.permute.xlu0 0
    %128 = vperm.xlu0 %127, %v66
    %v129 = vpop.permute.xlu0 %128
    %132 = vset.pattern.permute.xlu0 0
    %133 = vperm.xlu0 %132, %v67
    %v134 = vpop.permute.xlu0 %133
    %137 = vset.pattern.permute.xlu0 0
    %138 = vperm.xlu0 %137, %v68
    %v139 = vpop.permute.xlu0 %138
    %142 = vset.pattern.permute.xlu0 0
    %143 = vperm.xlu0 %142, %v69
    %v144 = vpop.permute.xlu0 %143
    %147 = vset.pattern.permute.xlu0 0
    %148 = vperm.xlu0 %147, %v70
    %v149 = vpop.permute.xlu0 %148
    %152 = vset.pattern.permute.xlu0 0
    %153 = vperm.xlu0 %152, %v71
    %v154 = vpop.permute.xlu0 %153
    %157 = vset.pattern.permute.xlu0 0
    %158 = vperm.xlu0 %157, %v72
    %v159 = vpop.permute.xlu0 %158
    %162 = vset.pattern.permute.xlu0 0
    %163 = vperm.xlu0 %162, %v73
    %v164 = vpop.permute.xlu0 %163
    %167 = vset.pattern.permute.xlu0 0
    %168 = vperm.xlu0 %167, %v74
    %v169 = vpop.permute.xlu0 %168
    %172 = vset.pattern.permute.xlu0 0
    %173 = vperm.xlu0 %172, %v75
    %v174 = vpop.permute.xlu0 %173
    %177 = vset.pattern.permute.xlu0 0
    %178 = vperm.xlu0 %177, %v76
    %v179 = vpop.permute.xlu0 %178
    %182 = vset.pattern.permute.xlu0 0
    %183 = vperm.xlu0 %182, %v77
    %v184 = vpop.permute.xlu0 %183
    %187 = vset.pattern.permute.xlu0 0
    %188 = vperm.xlu0 %187, %v78
    %v189 = vpop.permute.xlu0 %188
    %v191 = vmul.f32 %v114, %v95
    %v192 = vmul.f32 %v119, %v96
    %v193 = vmul.f32 %v124, %v97
    %v194 = vmul.f32 %v129, %v98
    %v195 = vmul.f32 %v134, %v99
    %v196 = vmul.f32 %v139, %v100
    %v197 = vmul.f32 %v144, %v101
    %v198 = vmul.f32 %v149, %v102
    %v199 = vmul.f32 %v154, %v103
    %v200 = vmul.f32 %v159, %v104
    %v201 = vmul.f32 %v164, %v105
    %v202 = vmul.f32 %v169, %v106
    %v203 = vmul.f32 %v174, %v107
    %v204 = vmul.f32 %v179, %v108
    %v205 = vmul.f32 %v184, %v109
    %v206 = vmul.f32 %v189, %v110
    %v207 = vsub.f32 1.0, %v63
    %v208 = vsub.f32 1.0, %v64
    %v209 = vsub.f32 1.0, %v65
    %v210 = vsub.f32 1.0, %v66
    %v211 = vsub.f32 1.0, %v67
    %v212 = vsub.f32 1.0, %v68
    %v213 = vsub.f32 1.0, %v69
    %v214 = vsub.f32 1.0, %v70
    %v215 = vsub.f32 1.0, %v71
    %v216 = vsub.f32 1.0, %v72
    %v217 = vsub.f32 1.0, %v73
    %v218 = vsub.f32 1.0, %v74
    %v219 = vsub.f32 1.0, %v75
    %v220 = vsub.f32 1.0, %v76
    %v221 = vsub.f32 1.0, %v77
    %v222 = vsub.f32 1.0, %v78
    %v223 = vld [vmem:[%s1] sm:$0xf]
    %v224 = vld [vmem:[%s1 + $0x4] sm:$0xf]
    %v225 = vld [vmem:[%s1 + $0x8] sm:$0xf]
    %v226 = vld [vmem:[%s1 + $0xc] sm:$0xf]
    %v227 = vld [vmem:[%s1 + $0x10] sm:$0xf]
    %v228 = vld [vmem:[%s1 + $0x14] sm:$0xf]
    %v229 = vld [vmem:[%s1 + $0x18] sm:$0xf]
    %v230 = vld [vmem:[%s1 + $0x1c] sm:$0xf]
    %v231 = vld [vmem:[%s1 + $0x20] sm:$0xf]
    %v232 = vld [vmem:[%s1 + $0x24] sm:$0xf]
    %v233 = vld [vmem:[%s1 + $0x28] sm:$0xf]
    %v234 = vld [vmem:[%s1 + $0x2c] sm:$0xf]
    %v235 = vld [vmem:[%s1 + $0x30] sm:$0xf]
    %v236 = vld [vmem:[%s1 + $0x34] sm:$0xf]
    %v237 = vld [vmem:[%s1 + $0x38] sm:$0xf]
    %v238 = vld [vmem:[%s1 + $0x3c] sm:$0xf]
    %v239 = vunpack.c.l.bf16 %v223
    %v240 = vunpack.c.l.bf16 %v224
    %v241 = vunpack.c.l.bf16 %v225
    %v242 = vunpack.c.l.bf16 %v226
    %v243 = vunpack.c.l.bf16 %v227
    %v244 = vunpack.c.l.bf16 %v228
    %v245 = vunpack.c.l.bf16 %v229
    %v246 = vunpack.c.l.bf16 %v230
    %v247 = vunpack.c.l.bf16 %v231
    %v248 = vunpack.c.l.bf16 %v232
    %v249 = vunpack.c.l.bf16 %v233
    %v250 = vunpack.c.l.bf16 %v234
    %v251 = vunpack.c.l.bf16 %v235
    %v252 = vunpack.c.l.bf16 %v236
    %v253 = vunpack.c.l.bf16 %v237
    %v254 = vunpack.c.l.bf16 %v238
    %256 = vset.pattern.permute.xlu0 0
    %257 = vperm.xlu0 %256, %v207
    %v258 = vpop.permute.xlu0 %257
    %261 = vset.pattern.permute.xlu0 0
    %262 = vperm.xlu0 %261, %v208
    %v263 = vpop.permute.xlu0 %262
    %266 = vset.pattern.permute.xlu0 0
    %267 = vperm.xlu0 %266, %v209
    %v268 = vpop.permute.xlu0 %267
    %271 = vset.pattern.permute.xlu0 0
    %272 = vperm.xlu0 %271, %v210
    %v273 = vpop.permute.xlu0 %272
    %276 = vset.pattern.permute.xlu0 0
    %277 = vperm.xlu0 %276, %v211
    %v278 = vpop.permute.xlu0 %277
    %281 = vset.pattern.permute.xlu0 0
    %282 = vperm.xlu0 %281, %v212
    %v283 = vpop.permute.xlu0 %282
    %286 = vset.pattern.permute.xlu0 0
    %287 = vperm.xlu0 %286, %v213
    %v288 = vpop.permute.xlu0 %287
    %291 = vset.pattern.permute.xlu0 0
    %292 = vperm.xlu0 %291, %v214
    %v293 = vpop.permute.xlu0 %292
    %296 = vset.pattern.permute.xlu0 0
    %297 = vperm.xlu0 %296, %v215
    %v298 = vpop.permute.xlu0 %297
    %301 = vset.pattern.permute.xlu0 0
    %302 = vperm.xlu0 %301, %v216
    %v303 = vpop.permute.xlu0 %302
    %306 = vset.pattern.permute.xlu0 0
    %307 = vperm.xlu0 %306, %v217
    %v308 = vpop.permute.xlu0 %307
    %311 = vset.pattern.permute.xlu0 0
    %312 = vperm.xlu0 %311, %v218
    %v313 = vpop.permute.xlu0 %312
    %316 = vset.pattern.permute.xlu0 0
    %317 = vperm.xlu0 %316, %v219
    %v318 = vpop.permute.xlu0 %317
    %321 = vset.pattern.permute.xlu0 0
    %322 = vperm.xlu0 %321, %v220
    %v323 = vpop.permute.xlu0 %322
    %326 = vset.pattern.permute.xlu0 0
    %327 = vperm.xlu0 %326, %v221
    %v328 = vpop.permute.xlu0 %327
    %331 = vset.pattern.permute.xlu0 0
    %332 = vperm.xlu0 %331, %v222
    %v333 = vpop.permute.xlu0 %332
    %v335 = vmul.f32 %v258, %v239
    %v336 = vmul.f32 %v263, %v240
    %v337 = vmul.f32 %v268, %v241
    %v338 = vmul.f32 %v273, %v242
    %v339 = vmul.f32 %v278, %v243
    %v340 = vmul.f32 %v283, %v244
    %v341 = vmul.f32 %v288, %v245
    %v342 = vmul.f32 %v293, %v246
    %v343 = vmul.f32 %v298, %v247
    %v344 = vmul.f32 %v303, %v248
    %v345 = vmul.f32 %v308, %v249
    %v346 = vmul.f32 %v313, %v250
    %v347 = vmul.f32 %v318, %v251
    %v348 = vmul.f32 %v323, %v252
    %v349 = vmul.f32 %v328, %v253
    %v350 = vmul.f32 %v333, %v254
    %v351 = vadd.f32 %v191, %v335
    %v352 = vadd.f32 %v192, %v336
    %v353 = vadd.f32 %v193, %v337
    %v354 = vadd.f32 %v194, %v338
    %v355 = vadd.f32 %v195, %v339
    %v356 = vadd.f32 %v196, %v340
    %v357 = vadd.f32 %v197, %v341
    %v358 = vadd.f32 %v198, %v342
    %v359 = vadd.f32 %v199, %v343
    %v360 = vadd.f32 %v200, %v344
    %v361 = vadd.f32 %v201, %v345
    %v362 = vadd.f32 %v202, %v346
    %v363 = vadd.f32 %v203, %v347
    %v364 = vadd.f32 %v204, %v348
    %v365 = vadd.f32 %v205, %v349
    %v366 = vadd.f32 %v206, %v350
    %v367 = vld [vmem:[#allocation2] sm:$0xff]
    %v368 = vld [vmem:[#allocation2 + $0x8] sm:$0xff]
    %v369 = vld [vmem:[#allocation2 + $0x10] sm:$0xff]
    %v370 = vld [vmem:[#allocation2 + $0x18] sm:$0xff]
    %v371 = vld [vmem:[#allocation2 + $0x20] sm:$0xff]
    %v372 = vld [vmem:[#allocation2 + $0x28] sm:$0xff]
    %v373 = vld [vmem:[#allocation2 + $0x30] sm:$0xff]
    %v374 = vld [vmem:[#allocation2 + $0x38] sm:$0xff]
    %v375 = vld [vmem:[#allocation2 + $0x40] sm:$0xff]
    %v376 = vld [vmem:[#allocation2 + $0x48] sm:$0xff]
    %v377 = vld [vmem:[#allocation2 + $0x50] sm:$0xff]
    %v378 = vld [vmem:[#allocation2 + $0x58] sm:$0xff]
    %v379 = vld [vmem:[#allocation2 + $0x60] sm:$0xff]
    %v380 = vld [vmem:[#allocation2 + $0x68] sm:$0xff]
    %v381 = vld [vmem:[#allocation2 + $0x70] sm:$0xff]
    %v382 = vld [vmem:[#allocation2 + $0x78] sm:$0xff]
    %v383 = vpack.c.bf16 %v352, %v351
    %v384 = vpack.c.bf16 %v354, %v353
    %v385 = vpack.c.bf16 %v356, %v355
    %v386 = vpack.c.bf16 %v358, %v357
    %v387 = vpack.c.bf16 %v360, %v359
    %v388 = vpack.c.bf16 %v362, %v361
    %v389 = vpack.c.bf16 %v364, %v363
    %v390 = vpack.c.bf16 %v366, %v365
    %v391 = vld [vmem:[#allocation3] sm:$0xf]
    %v392 = vld [vmem:[#allocation3 + $0x4] sm:$0xf]
    %v393 = vld [vmem:[#allocation3 + $0x8] sm:$0xf]
    %v394 = vld [vmem:[#allocation3 + $0xc] sm:$0xf]
    %v395 = vld [vmem:[#allocation3 + $0x10] sm:$0xf]
    %v396 = vld [vmem:[#allocation3 + $0x14] sm:$0xf]
    %v397 = vld [vmem:[#allocation3 + $0x18] sm:$0xf]
    %v398 = vld [vmem:[#allocation3 + $0x1c] sm:$0xf]
    %v399 = vld [vmem:[#allocation3 + $0x20] sm:$0xf]
    %v400 = vld [vmem:[#allocation3 + $0x24] sm:$0xf]
    %v401 = vld [vmem:[#allocation3 + $0x28] sm:$0xf]
    %v402 = vld [vmem:[#allocation3 + $0x2c] sm:$0xf]
    %v403 = vld [vmem:[#allocation3 + $0x30] sm:$0xf]
    %v404 = vld [vmem:[#allocation3 + $0x34] sm:$0xf]
    %v405 = vld [vmem:[#allocation3 + $0x38] sm:$0xf]
    %v406 = vld [vmem:[#allocation3 + $0x3c] sm:$0xf]
    %v423 = vunpack.c.l.b16 %v391
    %v424 = vunpack.c.l.b16 %v392
    %v425 = vunpack.c.l.b16 %v393
    %v426 = vunpack.c.l.b16 %v394
    %v427 = vunpack.c.l.b16 %v395
    %v428 = vunpack.c.l.b16 %v396
    %v429 = vunpack.c.l.b16 %v397
    %v430 = vunpack.c.l.b16 %v398
    %v431 = vunpack.c.l.b16 %v399
    %v432 = vunpack.c.l.b16 %v400
    %v433 = vunpack.c.l.b16 %v401
    %v434 = vunpack.c.l.b16 %v402
    %v435 = vunpack.c.l.b16 %v403
    %v436 = vunpack.c.l.b16 %v404
    %v437 = vunpack.c.l.b16 %v405
    %v438 = vunpack.c.l.b16 %v406
    %v439 = vpack.c.b16 %v424, %v423
    %v440 = vpack.c.b16 %v426, %v425
    %v441 = vpack.c.b16 %v428, %v427
    %v442 = vpack.c.b16 %v430, %v429
    %v443 = vpack.c.b16 %v432, %v431
    %v444 = vpack.c.b16 %v434, %v433
    %v445 = vpack.c.b16 %v436, %v435
    %v446 = vpack.c.b16 %v438, %v437
    %455 = vmatpush.bf16.msra.mxu0 %v446
    %456 = vmatpush.bf16.msra.mxu0 %v445
    %457 = vmatpush.bf16.msra.mxu0 %v444
    %458 = vmatpush.bf16.msra.mxu0 %v443
    %459 = vmatpush.bf16.msra.mxu0 %v442
    %460 = vmatpush.bf16.msra.mxu0 %v441
    %461 = vmatpush.bf16.msra.mxu0 %v440
    %462 = vmatpush.bf16.msra.mxu0 %v439
    %463 = vmatmul.bf16.gmra.mxu0 %v383
    %v464 = vpop.f32.mrf.mxu0
    %v465 = vadd.f32 0.0, %v464
    %v466 = vpop.f32.mrf.mxu0
    %v467 = vadd.f32 0.0, %v466
    %468 = vmatmul.bf16.gmra.mxu0 %v384
    %v469 = vpop.f32.mrf.mxu0
    %v470 = vadd.f32 0.0, %v469
    %v471 = vpop.f32.mrf.mxu0
    %v472 = vadd.f32 0.0, %v471
    %473 = vmatmul.bf16.gmra.mxu0 %v385
    %v474 = vpop.f32.mrf.mxu0
    %v475 = vadd.f32 0.0, %v474
    %v476 = vpop.f32.mrf.mxu0
    %v477 = vadd.f32 0.0, %v476
    %478 = vmatmul.bf16.gmra.mxu0 %v386
    %v479 = vpop.f32.mrf.mxu0
    %v480 = vadd.f32 0.0, %v479
    %v481 = vpop.f32.mrf.mxu0
    %v482 = vadd.f32 0.0, %v481
    %483 = vmatmul.bf16.gmra.mxu0 %v387
    %v484 = vpop.f32.mrf.mxu0
    %v485 = vadd.f32 0.0, %v484
    %v486 = vpop.f32.mrf.mxu0
    %v487 = vadd.f32 0.0, %v486
    %488 = vmatmul.bf16.gmra.mxu0 %v388
    %v489 = vpop.f32.mrf.mxu0
    %v490 = vadd.f32 0.0, %v489
    %v491 = vpop.f32.mrf.mxu0
    %v492 = vadd.f32 0.0, %v491
    %493 = vmatmul.bf16.gmra.mxu0 %v389
    %v494 = vpop.f32.mrf.mxu0
    %v495 = vadd.f32 0.0, %v494
    %v496 = vpop.f32.mrf.mxu0
    %v497 = vadd.f32 0.0, %v496
    %498 = vmatmul.bf16.gmra.mxu0 %v390
    %v499 = vpop.f32.mrf.mxu0
    %v500 = vadd.f32 0.0, %v499
    %v501 = vpop.f32.mrf.mxu0
    %v502 = vadd.f32 0.0, %v501
    %503 = vdwg.mxu0
    %v504 = vadd.f32 %v367, %v465
    %v505 = vadd.f32 %v368, %v467
    %v506 = vadd.f32 %v369, %v470
    %v507 = vadd.f32 %v370, %v472
    %v508 = vadd.f32 %v371, %v475
    %v509 = vadd.f32 %v372, %v477
    %v510 = vadd.f32 %v373, %v480
    %v511 = vadd.f32 %v374, %v482
    %v512 = vadd.f32 %v375, %v485
    %v513 = vadd.f32 %v376, %v487
    %v514 = vadd.f32 %v377, %v490
    %v515 = vadd.f32 %v378, %v492
    %v516 = vadd.f32 %v379, %v495
    %v517 = vadd.f32 %v380, %v497
    %v518 = vadd.f32 %v381, %v500
    %v519 = vadd.f32 %v382, %v502
    %520 = vst [vmem:[#allocation2] sm:$0xff] %v504
    %521 = vst [vmem:[#allocation2 + $0x8] sm:$0xff] %v505
    %522 = vst [vmem:[#allocation2 + $0x10] sm:$0xff] %v506
    %523 = vst [vmem:[#allocation2 + $0x18] sm:$0xff] %v507
    %524 = vst [vmem:[#allocation2 + $0x20] sm:$0xff] %v508
    %525 = vst [vmem:[#allocation2 + $0x28] sm:$0xff] %v509
    %526 = vst [vmem:[#allocation2 + $0x30] sm:$0xff] %v510
    %527 = vst [vmem:[#allocation2 + $0x38] sm:$0xff] %v511
    %528 = vst [vmem:[#allocation2 + $0x40] sm:$0xff] %v512
    %529 = vst [vmem:[#allocation2 + $0x48] sm:$0xff] %v513
    %530 = vst [vmem:[#allocation2 + $0x50] sm:$0xff] %v514
    %531 = vst [vmem:[#allocation2 + $0x58] sm:$0xff] %v515
    %532 = vst [vmem:[#allocation2 + $0x60] sm:$0xff] %v516
    %533 = vst [vmem:[#allocation2 + $0x68] sm:$0xff] %v517
    %534 = vst [vmem:[#allocation2 + $0x70] sm:$0xff] %v518
    %535 = vst [vmem:[#allocation2 + $0x78] sm:$0xff] %v519
    // Predicated region
    $region38: #{tpu_custom_call.1} parent=1 // pred_check
      %p536 = pneg %p43
    $region39: #{tpu_custom_call.1} parent=1 // pred_check_branch
      %538 = sbr.rel (%p536) target = $region41
    $region40: #{tpu_custom_call.1} parent=1 // pred_region
      %v539 = vld [vmem:[%s6] sm:$0x1]
      %v540 = vld [vmem:[%s4] sm:$0xff]
      %v541 = vld [vmem:[%s4 + $0x8] sm:$0xff]
      %v542 = vld [vmem:[%s4 + $0x10] sm:$0xff]
      %v543 = vld [vmem:[%s4 + $0x18] sm:$0xff]
      %v544 = vld [vmem:[%s4 + $0x20] sm:$0xff]
      %v545 = vld [vmem:[%s4 + $0x28] sm:$0xff]
      %v546 = vld [vmem:[%s4 + $0x30] sm:$0xff]
      %v547 = vld [vmem:[%s4 + $0x38] sm:$0xff]
      %v548 = vld [vmem:[%s4 + $0x40] sm:$0xff]
      %v549 = vld [vmem:[%s4 + $0x48] sm:$0xff]
      %v550 = vld [vmem:[%s4 + $0x50] sm:$0xff]
      %v551 = vld [vmem:[%s4 + $0x58] sm:$0xff]
      %v552 = vld [vmem:[%s4 + $0x60] sm:$0xff]
      %v553 = vld [vmem:[%s4 + $0x68] sm:$0xff]
      %v554 = vld [vmem:[%s4 + $0x70] sm:$0xff]
      %v555 = vld [vmem:[%s4 + $0x78] sm:$0xff]
      %v557 = vperm.slane %v539, 0
      %v559 = vadd.f32 %v540, %v557
      %v560 = vadd.f32 %v541, %v557
      %v561 = vadd.f32 %v542, %v557
      %v562 = vadd.f32 %v543, %v557
      %v563 = vadd.f32 %v544, %v557
      %v564 = vadd.f32 %v545, %v557
      %v565 = vadd.f32 %v546, %v557
      %v566 = vadd.f32 %v547, %v557
      %v567 = vadd.f32 %v548, %v557
      %v568 = vadd.f32 %v549, %v557
      %v569 = vadd.f32 %v550, %v557
      %v570 = vadd.f32 %v551, %v557
      %v571 = vadd.f32 %v552, %v557
      %v572 = vadd.f32 %v553, %v557
      %v573 = vadd.f32 %v554, %v557
      %v574 = vadd.f32 %v555, %v557
      %v575 = vld [vmem:[#allocation2] sm:$0xff]
      %v576 = vld [vmem:[#allocation2 + $0x8] sm:$0xff]
      %v577 = vld [vmem:[#allocation2 + $0x10] sm:$0xff]
      %v578 = vld [vmem:[#allocation2 + $0x18] sm:$0xff]
      %v579 = vld [vmem:[#allocation2 + $0x20] sm:$0xff]
      %v580 = vld [vmem:[#allocation2 + $0x28] sm:$0xff]
      %v581 = vld [vmem:[#allocation2 + $0x30] sm:$0xff]
      %v582 = vld [vmem:[#allocation2 + $0x38] sm:$0xff]
      %v583 = vld [vmem:[#allocation2 + $0x40] sm:$0xff]
      %v584 = vld [vmem:[#allocation2 + $0x48] sm:$0xff]
      %v585 = vld [vmem:[#allocation2 + $0x50] sm:$0xff]
      %v586 = vld [vmem:[#allocation2 + $0x58] sm:$0xff]
      %v587 = vld [vmem:[#allocation2 + $0x60] sm:$0xff]
      %v588 = vld [vmem:[#allocation2 + $0x68] sm:$0xff]
      %v589 = vld [vmem:[#allocation2 + $0x70] sm:$0xff]
      %v590 = vld [vmem:[#allocation2 + $0x78] sm:$0xff]
      %v591 = vadd.f32 %v575, %v557
      %v592 = vadd.f32 %v576, %v557
      %v593 = vadd.f32 %v577, %v557
      %v594 = vadd.f32 %v578, %v557
      %v595 = vadd.f32 %v579, %v557
      %v596 = vadd.f32 %v580, %v557
      %v597 = vadd.f32 %v581, %v557
      %v598 = vadd.f32 %v582, %v557
      %v599 = vadd.f32 %v583, %v557
      %v600 = vadd.f32 %v584, %v557
      %v601 = vadd.f32 %v585, %v557
      %v602 = vadd.f32 %v586, %v557
      %v603 = vadd.f32 %v587, %v557
      %v604 = vadd.f32 %v588, %v557
      %v605 = vadd.f32 %v589, %v557
      %v606 = vadd.f32 %v590, %v557
      %v607 = vld [vmem:[%s5] sm:$0xff]
      %v608 = vld [vmem:[%s5 + $0x8] sm:$0xff]
      %v609 = vld [vmem:[%s5 + $0x10] sm:$0xff]
      %v610 = vld [vmem:[%s5 + $0x18] sm:$0xff]
      %v611 = vld [vmem:[%s5 + $0x20] sm:$0xff]
      %v612 = vld [vmem:[%s5 + $0x28] sm:$0xff]
      %v613 = vld [vmem:[%s5 + $0x30] sm:$0xff]
      %v614 = vld [vmem:[%s5 + $0x38] sm:$0xff]
      %v615 = vld [vmem:[%s5 + $0x40] sm:$0xff]
      %v616 = vld [vmem:[%s5 + $0x48] sm:$0xff]
      %v617 = vld [vmem:[%s5 + $0x50] sm:$0xff]
      %v618 = vld [vmem:[%s5 + $0x58] sm:$0xff]
      %v619 = vld [vmem:[%s5 + $0x60] sm:$0xff]
      %v620 = vld [vmem:[%s5 + $0x68] sm:$0xff]
      %v621 = vld [vmem:[%s5 + $0x70] sm:$0xff]
      %v622 = vld [vmem:[%s5 + $0x78] sm:$0xff]
      %v623 = vmul.f32 %v607, 0.1
      %v624 = vmul.f32 %v608, 0.1
      %v625 = vmul.f32 %v609, 0.1
      %v626 = vmul.f32 %v610, 0.1
      %v627 = vmul.f32 %v611, 0.1
      %v628 = vmul.f32 %v612, 0.1
      %v629 = vmul.f32 %v613, 0.1
      %v630 = vmul.f32 %v614, 0.1
      %v631 = vmul.f32 %v615, 0.1
      %v632 = vmul.f32 %v616, 0.1
      %v633 = vmul.f32 %v617, 0.1
      %v634 = vmul.f32 %v618, 0.1
      %v635 = vmul.f32 %v619, 0.1
      %v636 = vmul.f32 %v620, 0.1
      %v637 = vmul.f32 %v621, 0.1
      %v638 = vmul.f32 %v622, 0.1
      %640 = vset.pattern.permute.xlu0 0
      %641 = vperm.xlu0 %640, %v623
      %v642 = vpop.permute.xlu0 %641
      %645 = vset.pattern.permute.xlu0 0
      %646 = vperm.xlu0 %645, %v624
      %v647 = vpop.permute.xlu0 %646
      %650 = vset.pattern.permute.xlu0 0
      %651 = vperm.xlu0 %650, %v625
      %v652 = vpop.permute.xlu0 %651
      %655 = vset.pattern.permute.xlu0 0
      %656 = vperm.xlu0 %655, %v626
      %v657 = vpop.permute.xlu0 %656
      %660 = vset.pattern.permute.xlu0 0
      %661 = vperm.xlu0 %660, %v627
      %v662 = vpop.permute.xlu0 %661
      %665 = vset.pattern.permute.xlu0 0
      %666 = vperm.xlu0 %665, %v628
      %v667 = vpop.permute.xlu0 %666
      %670 = vset.pattern.permute.xlu0 0
      %671 = vperm.xlu0 %670, %v629
      %v672 = vpop.permute.xlu0 %671
      %675 = vset.pattern.permute.xlu0 0
      %676 = vperm.xlu0 %675, %v630
      %v677 = vpop.permute.xlu0 %676
      %680 = vset.pattern.permute.xlu0 0
      %681 = vperm.xlu0 %680, %v631
      %v682 = vpop.permute.xlu0 %681
      %685 = vset.pattern.permute.xlu0 0
      %686 = vperm.xlu0 %685, %v632
      %v687 = vpop.permute.xlu0 %686
      %690 = vset.pattern.permute.xlu0 0
      %691 = vperm.xlu0 %690, %v633
      %v692 = vpop.permute.xlu0 %691
      %695 = vset.pattern.permute.xlu0 0
      %696 = vperm.xlu0 %695, %v634
      %v697 = vpop.permute.xlu0 %696
      %700 = vset.pattern.permute.xlu0 0
      %701 = vperm.xlu0 %700, %v635
      %v702 = vpop.permute.xlu0 %701
      %705 = vset.pattern.permute.xlu0 0
      %706 = vperm.xlu0 %705, %v636
      %v707 = vpop.permute.xlu0 %706
      %710 = vset.pattern.permute.xlu0 0
      %711 = vperm.xlu0 %710, %v637
      %v712 = vpop.permute.xlu0 %711
      %715 = vset.pattern.permute.xlu0 0
      %716 = vperm.xlu0 %715, %v638
      %v717 = vpop.permute.xlu0 %716
      %v719 = vmul.f32 %v642, %v559
      %v720 = vmul.f32 %v647, %v560
      %v721 = vmul.f32 %v652, %v561
      %v722 = vmul.f32 %v657, %v562
      %v723 = vmul.f32 %v662, %v563
      %v724 = vmul.f32 %v667, %v564
      %v725 = vmul.f32 %v672, %v565
      %v726 = vmul.f32 %v677, %v566
      %v727 = vmul.f32 %v682, %v567
      %v728 = vmul.f32 %v687, %v568
      %v729 = vmul.f32 %v692, %v569
      %v730 = vmul.f32 %v697, %v570
      %v731 = vmul.f32 %v702, %v571
      %v732 = vmul.f32 %v707, %v572
      %v733 = vmul.f32 %v712, %v573
      %v734 = vmul.f32 %v717, %v574
      %v735 = vadd.f32 %v591, %v719
      %v736 = vadd.f32 %v592, %v720
      %v737 = vadd.f32 %v593, %v721
      %v738 = vadd.f32 %v594, %v722
      %v739 = vadd.f32 %v595, %v723
      %v740 = vadd.f32 %v596, %v724
      %v741 = vadd.f32 %v597, %v725
      %v742 = vadd.f32 %v598, %v726
      %v743 = vadd.f32 %v599, %v727
      %v744 = vadd.f32 %v600, %v728
      %v745 = vadd.f32 %v601, %v729
      %v746 = vadd.f32 %v602, %v730
      %v747 = vadd.f32 %v603, %v731
      %v748 = vadd.f32 %v604, %v732
      %v749 = vadd.f32 %v605, %v733
      %v750 = vadd.f32 %v606, %v734
      %751 = vst [vmem:[#allocation6] sm:$0xff] %v735
      %752 = vst [vmem:[#allocation6 + $0x8] sm:$0xff] %v736
      %753 = vst [vmem:[#allocation6 + $0x10] sm:$0xff] %v737
      %754 = vst [vmem:[#allocation6 + $0x18] sm:$0xff] %v738
      %755 = vst [vmem:[#allocation6 + $0x20] sm:$0xff] %v739
      %756 = vst [vmem:[#allocation6 + $0x28] sm:$0xff] %v740
      %757 = vst [vmem:[#allocation6 + $0x30] sm:$0xff] %v741
      %758 = vst [vmem:[#allocation6 + $0x38] sm:$0xff] %v742
      %759 = vst [vmem:[#allocation6 + $0x40] sm:$0xff] %v743
      %760 = vst [vmem:[#allocation6 + $0x48] sm:$0xff] %v744
      %761 = vst [vmem:[#allocation6 + $0x50] sm:$0xff] %v745
      %762 = vst [vmem:[#allocation6 + $0x58] sm:$0xff] %v746
      %763 = vst [vmem:[#allocation6 + $0x60] sm:$0xff] %v747
      %764 = vst [vmem:[#allocation6 + $0x68] sm:$0xff] %v748
      %765 = vst [vmem:[#allocation6 + $0x70] sm:$0xff] %v749
      %766 = vst [vmem:[#allocation6 + $0x78] sm:$0xff] %v750
    $region41: #{tpu_custom_call.1} parent=1 // pred_fallthru
      _
    // Predicated region
    $region42: #{tpu_custom_call.1} parent=1 // pred_check
      _
    $region43: #{tpu_custom_call.1} parent=1 // pred_check_branch
      %768 = sbr.rel (0) target = $region45
    $region44: #{tpu_custom_call.1} parent=1 // pred_region
      %770 = vsyncadd [#allocation5], 0
      %s771 = sshll.u32 [#allocation6], 4
      %s772 = int_to_ptr.vmem [resolvable:$true] %s771
      %s773 = sshll.u32 %s7, 4
      %s774 = int_to_ptr.hbm [resolvable:$true] %s773
      %779 = dma.vmem_to_hbm [thread:$0]  %s772, 2048, %s774, [#allocation5], 128, 128, 8
    $region45: #{tpu_custom_call.1} parent=1 // pred_fallthru
      _
    // Predicated region
    $region46: #{tpu_custom_call.1} parent=1 // pred_check
      _
    $region47: #{tpu_custom_call.1} parent=1 // pred_check_branch
      %781 = sbr.rel (0) target = $region49
    $region48: #{tpu_custom_call.1} parent=1 // pred_region
      %783 = dma.done [#allocation5], 2048
    $region49: #{tpu_custom_call.1} parent=1 // pred_fallthru
      _
    %784 = vsyncpa [#allocation4], 1
    %785 = vsyncpa [#allocation5], 1

</llo_original>
